<compile_context>
chip_gen: v5e
topology: v5e:2x2
jax: 0.10.0
libtpu: 0.0.40
codegen_flags: <defaults>
</compile_context>

<pallas_src>
import jax
import jax.numpy as jnp
from jax.experimental import pallas as pl
from jax.experimental.pallas import tpu as pltpu


def _part_composition_kernel(p_ref, prm_ref, o_ref):
    # p_ref  : (3, 1, tb, ts) float32 -- x/y/z planes of the point block for primitive p
    # prm_ref: (1, tb, 16)    float32 -- [trans(3), rotmat(9, row-major), |shape|(3), penalty(1)]
    # o_ref  : (tb, ts)       float32 -- running min over primitives (resident accumulator)
    p_id = pl.program_id(2)

    prm = prm_ref[0]                                     # (tb, 16)
    tx, ty, tz = prm[:, 0:1], prm[:, 1:2], prm[:, 2:3]
    m00, m01, m02 = prm[:, 3:4], prm[:, 4:5], prm[:, 5:6]
    m10, m11, m12 = prm[:, 6:7], prm[:, 7:8], prm[:, 8:9]
    m20, m21, m22 = prm[:, 9:10], prm[:, 10:11], prm[:, 11:12]
    sx, sy, sz = prm[:, 12:13], prm[:, 13:14], prm[:, 14:15]
    pen = prm[:, 15:16]

    # rigidTsdf: translate by -t, then rotate by the precomputed (un-normalized) matrix of q.
    px = p_ref[0, 0] - tx                                # (tb, ts)
    py = p_ref[1, 0] - ty
    pz = p_ref[2, 0] - tz

    rx = m00 * px + m01 * py + m02 * pz
    ry = m10 * px + m11 * py + m12 * pz
    rz = m20 * px + m21 * py + m22 * pz

    # cuboid tsdf (if_mutex=False): sum_c relu(|r_c| - |shape_c|)^2, then +(1 - inUse)
    dx = jnp.maximum(jnp.abs(rx) - sx, 0.0)
    dy = jnp.maximum(jnp.abs(ry) - sy, 0.0)
    dz = jnp.maximum(jnp.abs(rz) - sz, 0.0)
    val = dx * dx + dy * dy + dz * dz + pen              # (tb, ts)

    @pl.when(p_id == 0)
    def _():
        o_ref[...] = val                                 # first primitive: no inf init needed

    @pl.when(p_id > 0)
    def _():
        o_ref[...] = jnp.minimum(o_ref[...], val)


def _choose_tiles(B, S, vmem_budget_bytes=24 << 20):
    """Pick (tb, b_pad, ts, s_pad). VMEM per step ≈ 32 * tb * ts bytes (2x point DB + output)."""
    elem_budget = max(1024, vmem_budget_bytes // 32)     # tb * ts element budget
    rows_fit = elem_budget // max(S, 1)
    if rows_fit >= min(B, 8):
        # Full S fits for a reasonable batch tile: only tile the batch axis.
        ts, s_pad = S, S
        if B <= rows_fit:
            return B, B, ts, s_pad                       # single full-B block (always legal)
        tb = max(8, (rows_fit // 8) * 8)                 # multiple of 8 for sublane alignment
        b_pad = ((B + tb - 1) // tb) * tb
        return tb, b_pad, ts, s_pad
    # S too large: tile the sample axis too (ts multiple of 128, lane-dense).
    if B < 8:
        tb, b_pad = B, B
    else:
        tb, b_pad = 8, ((B + 7) // 8) * 8
    ts = max(128, (elem_budget // tb // 128) * 128)
    s_pad = ((S + ts - 1) // ts) * ts
    return tb, b_pad, ts, s_pad


def part_composition(point, shape, trans, quat, in_use):
    """point: (B,P,S,3); shape,trans: (B,P,3); quat: (B,P,4); in_use: (B,P,1) -> ((B,S), (B,S))."""
    B, P, S, C = point.shape
    assert C == 3
    assert shape.shape == (B, P, 3) and trans.shape == (B, P, 3) and quat.shape == (B, P, 4)

    f32 = jnp.float32
    point = point.astype(f32)
    shape_abs = jnp.abs(shape.astype(f32))
    trans = trans.astype(f32)
    quat = quat.astype(f32)
    penalty = (1.0 - in_use.astype(f32)).reshape(B, P, 1)

    # Pre-expand q ⊗ [0,v] ⊗ q* into an (un-normalized) 3x3 matrix per (b, p):
    #   R v = (w^2 - |u|^2) v + 2 (u·v) u + 2 w (u × v),  u = (x, y, z)
    w, x, y, z = quat[..., 0], quat[..., 1], quat[..., 2], quat[..., 3]
    ww, xx, yy, zz = w * w, x * x, y * y, z * z
    wx, wy, wz = w * x, w * y, w * z
    xy, xz, yz = x * y, x * z, y * z
    rot = jnp.stack(
        [
            ww + xx - yy - zz, 2.0 * (xy - wz), 2.0 * (xz + wy),
            2.0 * (xy + wz), ww - xx + yy - zz, 2.0 * (yz - wx),
            2.0 * (xz - wy), 2.0 * (yz + wx), ww - xx - yy + zz,
        ],
        axis=-1,
    )                                                    # (B, P, 9)

    # Pack tiny per-primitive parameters: [trans, rotmat, |shape|, penalty] -> (P, B, 16)
    params = jnp.concatenate([trans, rot, shape_abs, penalty], axis=-1)
    params_cm = jnp.transpose(params, (1, 0, 2))         # (P, B, 16)

    # Coordinate-major point layout: (3, P, B, S) — S lane-dense, coords on a leading axis.
    point_cm = jnp.transpose(point, (3, 1, 0, 2))        # (3, P, B, S)

    tb, b_pad, ts, s_pad = _choose_tiles(B, S)
    if b_pad != B or s_pad != S:
        point_cm = jnp.pad(point_cm, ((0, 0), (0, 0), (0, b_pad - B), (0, s_pad - S)))
        params_cm = jnp.pad(params_cm, ((0, 0), (0, b_pad - B), (0, 0)))

    grid = (b_pad // tb, s_pad // ts, P)                 # reduction axis (P) last

    out = pl.pallas_call(
        _part_composition_kernel,
        out_shape=jax.ShapeDtypeStruct((b_pad, s_pad), f32),
        grid_spec=pltpu.PrefetchScalarGridSpec(
            num_scalar_prefetch=0,
            grid=grid,
            in_specs=[
                pl.BlockSpec((3, 1, tb, ts), lambda i, j, p: (0, p, i, j)),
                pl.BlockSpec((1, tb, 16), lambda i, j, p: (p, i, 0)),
            ],
            out_specs=pl.BlockSpec((tb, ts), lambda i, j, p: (i, j)),
        ),
        compiler_params=pltpu.CompilerParams(
            dimension_semantics=("parallel", "parallel", "arbitrary"),
            vmem_limit_bytes=48 << 20,
        ),
    )(point_cm, params_cm)

    tsdfout = out[:B, :S]                                # (B, S)
    temp_gt = jnp.zeros_like(tsdfout)
    return tsdfout, temp_gt


# ---------------- pure-JAX reference (literal quaternion products, mirrors the PyTorch module) ---


def _quat_mul(q1, q2):
    w1, x1, y1, z1 = jnp.split(q1, 4, axis=-1)
    w2, x2, y2, z2 = jnp.split(q2, 4, axis=-1)
    w = w1 * w2 - x1 * x2 - y1 * y2 - z1 * z2
    x = w1 * x2 + x1 * w2 + y1 * z2 - z1 * y2
    y = w1 * y2 + y1 * w2 + z1 * x2 - x1 * z2
    z = w1 * z2 + z1 * w2 + x1 * y2 - y1 * x2
    return jnp.concatenate([w, x, y, z], axis=-1)


def _reference(point, shape, trans, quat, in_use):
    B, P, S, _ = point.shape
    p1 = point - trans[:, :, None, :]
    zero = jnp.zeros((B, P, S, 1), point.dtype)
    p_quat = jnp.concatenate([zero, p1], axis=-1)                       # (B,P,S,4)
    q_rep = jnp.broadcast_to(quat[:, :, None, :], (B, P, S, 4))
    q_conj = q_rep * jnp.array([1.0, -1.0, -1.0, -1.0], point.dtype)
    rot = _quat_mul(_quat_mul(q_rep, p_quat), q_conj)[..., 1:4]         # (B,P,S,3)
    d = jnp.maximum(jnp.abs(rot) - jnp.abs(shape)[:, :, None, :], 0.0)
    tsdf = jnp.sum(d * d, axis=-1)                                      # (B,P,S)
    pen = (1.0 - in_use).reshape(B, P, 1)
    tsdfout = jnp.min(tsdf + pen, axis=1)                               # (B,S)
    return tsdfout, jnp.zeros_like(tsdfout)


if __name__ == "__main__":
    B, P, S = 2, 4, 128   # batch, primNum, nSamplePoints (S lane-aligned)
    key = jax.random.PRNGKey(0)
    kp, ks, kt, kq = jax.random.split(key, 4)
    point = jax.random.normal(kp, (B, P, S, 3), dtype=jnp.float32)
    shape = jax.random.uniform(ks, (B, P, 3), dtype=jnp.float32, minval=0.1, maxval=1.0)
    trans = 0.5 * jax.random.normal(kt, (B, P, 3), dtype=jnp.float32)
    quat = jax.random.normal(kq, (B, P, 4), dtype=jnp.float32)
    quat = quat / jnp.linalg.norm(quat, axis=-1, keepdims=True)
    in_use = jnp.ones((B, P, 1), dtype=jnp.float32).at[0, 1, 0].set(0.0).at[1, 3, 0].set(0.0)

    tsdfout, temp_gt = part_composition(point, shape, trans, quat, in_use)
    jax.block_until_ready(tsdfout)

    ref_out, _ = _reference(point, shape, trans, quat, in_use)
    assert tsdfout.shape == (B, S) and temp_gt.shape == (B, S)
    assert bool(jnp.all(temp_gt == 0.0))
    assert bool(jnp.allclose(tsdfout, ref_out, rtol=1e-5, atol=1e-5))
    print("KERNEL_OK")
</pallas_src>

<mosaic_0001>
module attributes {stable_mosaic.version = 11 : i64} {
  func.func @_part_composition_kernel(%arg0: i32, %arg1: i32, %arg2: i32, %arg3: memref<3x1x2x128xf32, #tpu.memory_space<vmem>>, %arg4: memref<1x2x16xf32, #tpu.memory_space<vmem>>, %arg5: memref<2x128xf32, #tpu.memory_space<vmem>>) attributes {dimension_semantics = [#tpu.dimension_semantics<parallel>, #tpu.dimension_semantics<parallel>, #tpu.dimension_semantics<arbitrary>], iteration_bounds = array<i64: 1, 1, 4>, scalar_prefetch = 0 : i64, scratch_operands = 0 : i64, tpu.core_type = #tpu.core_type<tc>, window_params = [{transform_indices = @transform_0, window_bounds = array<i64: 3, 1, 2, 128>}, {transform_indices = @transform_1, window_bounds = array<i64: 1, 2, 16>}, {transform_indices = @transform_2, window_bounds = array<i64: 2, 128>}]} {
    %c0 = arith.constant 0 : index
    %c0_0 = arith.constant 0 : index
    %c0_1 = arith.constant 0 : index
    %0 = vector.load %arg4[%c0, %c0_0, %c0_1] : memref<1x2x16xf32, #tpu.memory_space<vmem>>, vector<1x2x16xf32>
    %1 = vector.shape_cast %0 : vector<1x2x16xf32> to vector<2x16xf32>
    %2 = vector.extract_strided_slice %1 {offsets = [0, 0], sizes = [2, 1], strides = [1, 1]} : vector<2x16xf32> to vector<2x1xf32>
    %3 = vector.extract_strided_slice %1 {offsets = [0, 1], sizes = [2, 1], strides = [1, 1]} : vector<2x16xf32> to vector<2x1xf32>
    %4 = vector.extract_strided_slice %1 {offsets = [0, 2], sizes = [2, 1], strides = [1, 1]} : vector<2x16xf32> to vector<2x1xf32>
    %5 = vector.extract_strided_slice %1 {offsets = [0, 3], sizes = [2, 1], strides = [1, 1]} : vector<2x16xf32> to vector<2x1xf32>
    %6 = vector.extract_strided_slice %1 {offsets = [0, 4], sizes = [2, 1], strides = [1, 1]} : vector<2x16xf32> to vector<2x1xf32>
    %7 = vector.extract_strided_slice %1 {offsets = [0, 5], sizes = [2, 1], strides = [1, 1]} : vector<2x16xf32> to vector<2x1xf32>
    %8 = vector.extract_strided_slice %1 {offsets = [0, 6], sizes = [2, 1], strides = [1, 1]} : vector<2x16xf32> to vector<2x1xf32>
    %9 = vector.extract_strided_slice %1 {offsets = [0, 7], sizes = [2, 1], strides = [1, 1]} : vector<2x16xf32> to vector<2x1xf32>
    %10 = vector.extract_strided_slice %1 {offsets = [0, 8], sizes = [2, 1], strides = [1, 1]} : vector<2x16xf32> to vector<2x1xf32>
    %11 = vector.extract_strided_slice %1 {offsets = [0, 9], sizes = [2, 1], strides = [1, 1]} : vector<2x16xf32> to vector<2x1xf32>
    %12 = vector.extract_strided_slice %1 {offsets = [0, 10], sizes = [2, 1], strides = [1, 1]} : vector<2x16xf32> to vector<2x1xf32>
    %13 = vector.extract_strided_slice %1 {offsets = [0, 11], sizes = [2, 1], strides = [1, 1]} : vector<2x16xf32> to vector<2x1xf32>
    %14 = vector.extract_strided_slice %1 {offsets = [0, 12], sizes = [2, 1], strides = [1, 1]} : vector<2x16xf32> to vector<2x1xf32>
    %15 = vector.extract_strided_slice %1 {offsets = [0, 13], sizes = [2, 1], strides = [1, 1]} : vector<2x16xf32> to vector<2x1xf32>
    %16 = vector.extract_strided_slice %1 {offsets = [0, 14], sizes = [2, 1], strides = [1, 1]} : vector<2x16xf32> to vector<2x1xf32>
    %17 = vector.extract_strided_slice %1 {offsets = [0, 15], sizes = [2, 1], strides = [1, 1]} : vector<2x16xf32> to vector<2x1xf32>
    %c0_2 = arith.constant 0 : index
    %c0_3 = arith.constant 0 : index
    %c0_4 = arith.constant 0 : index
    %c0_5 = arith.constant 0 : index
    %18 = vector.load %arg3[%c0_2, %c0_3, %c0_4, %c0_5] : memref<3x1x2x128xf32, #tpu.memory_space<vmem>>, vector<1x1x2x128xf32>
    %19 = vector.shape_cast %18 : vector<1x1x2x128xf32> to vector<2x128xf32>
    %20 = vector.broadcast %2 : vector<2x1xf32> to vector<2x128xf32>
    %21 = arith.subf %19, %20 : vector<2x128xf32>
    %c1 = arith.constant 1 : index
    %c0_6 = arith.constant 0 : index
    %c0_7 = arith.constant 0 : index
    %c0_8 = arith.constant 0 : index
    %22 = vector.load %arg3[%c1, %c0_6, %c0_7, %c0_8] : memref<3x1x2x128xf32, #tpu.memory_space<vmem>>, vector<1x1x2x128xf32>
    %23 = vector.shape_cast %22 : vector<1x1x2x128xf32> to vector<2x128xf32>
    %24 = vector.broadcast %3 : vector<2x1xf32> to vector<2x128xf32>
    %25 = arith.subf %23, %24 : vector<2x128xf32>
    %c2 = arith.constant 2 : index
    %c0_9 = arith.constant 0 : index
    %c0_10 = arith.constant 0 : index
    %c0_11 = arith.constant 0 : index
    %26 = vector.load %arg3[%c2, %c0_9, %c0_10, %c0_11] : memref<3x1x2x128xf32, #tpu.memory_space<vmem>>, vector<1x1x2x128xf32>
    %27 = vector.shape_cast %26 : vector<1x1x2x128xf32> to vector<2x128xf32>
    %28 = vector.broadcast %4 : vector<2x1xf32> to vector<2x128xf32>
    %29 = arith.subf %27, %28 : vector<2x128xf32>
    %30 = vector.broadcast %5 : vector<2x1xf32> to vector<2x128xf32>
    %31 = arith.mulf %30, %21 : vector<2x128xf32>
    %32 = vector.broadcast %6 : vector<2x1xf32> to vector<2x128xf32>
    %33 = arith.mulf %32, %25 : vector<2x128xf32>
    %34 = arith.addf %31, %33 : vector<2x128xf32>
    %35 = vector.broadcast %7 : vector<2x1xf32> to vector<2x128xf32>
    %36 = arith.mulf %35, %29 : vector<2x128xf32>
    %37 = arith.addf %34, %36 : vector<2x128xf32>
    %38 = vector.broadcast %8 : vector<2x1xf32> to vector<2x128xf32>
    %39 = arith.mulf %38, %21 : vector<2x128xf32>
    %40 = vector.broadcast %9 : vector<2x1xf32> to vector<2x128xf32>
    %41 = arith.mulf %40, %25 : vector<2x128xf32>
    %42 = arith.addf %39, %41 : vector<2x128xf32>
    %43 = vector.broadcast %10 : vector<2x1xf32> to vector<2x128xf32>
    %44 = arith.mulf %43, %29 : vector<2x128xf32>
    %45 = arith.addf %42, %44 : vector<2x128xf32>
    %46 = vector.broadcast %11 : vector<2x1xf32> to vector<2x128xf32>
    %47 = arith.mulf %46, %21 : vector<2x128xf32>
    %48 = vector.broadcast %12 : vector<2x1xf32> to vector<2x128xf32>
    %49 = arith.mulf %48, %25 : vector<2x128xf32>
    %50 = arith.addf %47, %49 : vector<2x128xf32>
    %51 = vector.broadcast %13 : vector<2x1xf32> to vector<2x128xf32>
    %52 = arith.mulf %51, %29 : vector<2x128xf32>
    %53 = arith.addf %50, %52 : vector<2x128xf32>
    %54 = math.absf %37 : vector<2x128xf32>
    %55 = vector.broadcast %14 : vector<2x1xf32> to vector<2x128xf32>
    %56 = arith.subf %54, %55 : vector<2x128xf32>
    %cst = arith.constant 0.000000e+00 : f32
    %57 = vector.broadcast %cst : f32 to vector<2x128xf32>
    %58 = arith.maximumf %56, %57 : vector<2x128xf32>
    %59 = math.absf %45 : vector<2x128xf32>
    %60 = vector.broadcast %15 : vector<2x1xf32> to vector<2x128xf32>
    %61 = arith.subf %59, %60 : vector<2x128xf32>
    %cst_12 = arith.constant 0.000000e+00 : f32
    %62 = vector.broadcast %cst_12 : f32 to vector<2x128xf32>
    %63 = arith.maximumf %61, %62 : vector<2x128xf32>
    %64 = math.absf %53 : vector<2x128xf32>
    %65 = vector.broadcast %16 : vector<2x1xf32> to vector<2x128xf32>
    %66 = arith.subf %64, %65 : vector<2x128xf32>
    %cst_13 = arith.constant 0.000000e+00 : f32
    %67 = vector.broadcast %cst_13 : f32 to vector<2x128xf32>
    %68 = arith.maximumf %66, %67 : vector<2x128xf32>
    %69 = arith.mulf %58, %58 : vector<2x128xf32>
    %70 = arith.mulf %63, %63 : vector<2x128xf32>
    %71 = arith.addf %69, %70 : vector<2x128xf32>
    %72 = arith.mulf %68, %68 : vector<2x128xf32>
    %73 = arith.addf %71, %72 : vector<2x128xf32>
    %74 = vector.broadcast %17 : vector<2x1xf32> to vector<2x128xf32>
    %75 = arith.addf %73, %74 : vector<2x128xf32>
    %c0_i32 = arith.constant 0 : i32
    %76 = arith.cmpi eq, %arg2, %c0_i32 : i32
    %77 = arith.extui %76 : i1 to i32
    %c0_i32_14 = arith.constant 0 : i32
    %78 = arith.cmpi ne, %77, %c0_i32_14 : i32
    scf.if %78 {
      %c0_17 = arith.constant 0 : index
      %c0_18 = arith.constant 0 : index
      %82 = vector.load %arg5[%c0_17, %c0_18] : memref<2x128xf32, #tpu.memory_space<vmem>>, vector<2x128xf32>
      tpu.vector_store %arg5[%c0_17, %c0_18], %75 {strides = array<i32>} : memref<2x128xf32, #tpu.memory_space<vmem>>, vector<2x128xf32>,
    } else {
    }
    %c0_i32_15 = arith.constant 0 : i32
    %79 = arith.cmpi sgt, %arg2, %c0_i32_15 : i32
    %80 = arith.extui %79 : i1 to i32
    %c0_i32_16 = arith.constant 0 : i32
    %81 = arith.cmpi ne, %80, %c0_i32_16 : i32
    scf.if %81 {
      %c0_17 = arith.constant 0 : index
      %c0_18 = arith.constant 0 : index
      %82 = vector.load %arg5[%c0_17, %c0_18] : memref<2x128xf32, #tpu.memory_space<vmem>>, vector<2x128xf32>
      %83 = arith.minimumf %82, %75 : vector<2x128xf32>
      %c0_19 = arith.constant 0 : index
      %c0_20 = arith.constant 0 : index
      %84 = vector.load %arg5[%c0_19, %c0_20] : memref<2x128xf32, #tpu.memory_space<vmem>>, vector<2x128xf32>
      tpu.vector_store %arg5[%c0_19, %c0_20], %83 {strides = array<i32>} : memref<2x128xf32, #tpu.memory_space<vmem>>, vector<2x128xf32>,
    } else {
    }
    return
  }
  func.func @transform_0(%arg0: i32, %arg1: i32, %arg2: i32) -> (i32, i32, i32, i32) {
    %c0_i32 = arith.constant 0 : i32
    %c0_i32_0 = arith.constant 0 : i32
    return %c0_i32, %arg2, %arg0, %arg1 : i32, i32, i32, i32
  }
  func.func @transform_1(%arg0: i32, %arg1: i32, %arg2: i32) -> (i32, i32, i32) {
    %c0_i32 = arith.constant 0 : i32
    %c0_i32_0 = arith.constant 0 : i32
    return %arg2, %arg0, %c0_i32 : i32, i32, i32
  }
  func.func @transform_2(%arg0: i32, %arg1: i32, %arg2: i32) -> (i32, i32) {
    %c0_i32 = arith.constant 0 : i32
    return %arg0, %arg1 : i32, i32
  }
}

</mosaic_0001>

<llo_original>
// kernel: tpu_custom_call.1
$region0: #{tpu_custom_call.1}
  #allocation0 [shape = 'u32[]', space=smem, size = 0x4, offset = 0x4, fixed_abs, tag = 'smem constant byte address 0x4 - core index']
  #allocation1 [shape = 'u32[72,128]{1,0:T(1,128)}', space=vmem, size = 0x9000, scoped, tag = 'internal scratch']
  %s0 = inlined_call_operand.hbm [shape: f32[3,4,2,128], index: 0, kind: input, shape index: {}]
  %s1 = inlined_call_operand.hbm [shape: f32[4,2,16], index: 1, kind: input, shape index: {}]
  %s2 = inlined_call_operand.hbm [shape: f32[2,128], index: 2, kind: output, shape index: {}]
  %s3 = sld [smem:[#allocation0]]
  $region57: #{tpu_custom_call.1} parent=0
    _
  %s5 = ssub.s32 1, %s3
  %s6 = scalar_select 0, %s5, %s3
  $region1: #{tpu_custom_call.1} parent=0
    #allocation2 [shape = 'u8[6144]{0}', space=vmem, size = 0x1800, scoped, tag = 'input window, operand 0']
    #allocation3 [shape = 's32[2]{0}', space=sflag, size = 0x8, scoped, tag = 'scoped memory for tpu_custom_call.1']
    #allocation4 [shape = 's32[2]{0}', space=sflag, size = 0x8, scoped, tag = 'scoped memory for tpu_custom_call.1']
    #allocation5 [shape = 'u8[2048]{0}', space=vmem, size = 0x800, scoped, tag = 'input window, operand 1']
    #allocation6 [shape = 's32[2]{0}', space=sflag, size = 0x8, scoped, tag = 'scoped memory for tpu_custom_call.1']
    #allocation7 [shape = 'u8[1024]{0}', space=vmem, size = 0x400, scoped, tag = 'output window, operand 0, single buffered']
    %7 = vsyncpa [#allocation3], 0
    %s8 = scalar_lea.sflag [#allocation3], 1
    %9 = vsyncpa %s8, 0
    %10 = vsyncpa [#allocation6], 0
    %s11 = scalar_lea.sflag [#allocation6], 1
    %12 = vsyncpa %s11, 0
    %13 = vsyncpa [#allocation4], 0
    loop: start=0, step=1, limit=6
    $region2: #{tpu_custom_call.1} parent=1 // loop_pre_header
      _
    $region3: #{tpu_custom_call.1} parent=1 // loop_header
      %s15 = sphi 0, %s19
      %p16 = scmp.ge.s32.totalorder %s15, 6
      %s22 = sphi 0, %s41
      %s23 = sphi 0, %s37
      %s24 = sphi 0, %s33
      %s25 = sphi 0, %s22
      %s26 = sphi 0, %s23
      %s27 = sphi 0, %s24
      %s28 = sphi 0, %s25
      %s29 = sphi 0, %s26
      %s30 = sphi 0, %s27
      %s48 = sphi 0, %s50
      %s51 = sphi 0, %s48
      %s52 = sphi 0, %s51
      %s68 = sphi 0, %s52
      %s76 = sphi 0, %s78
      %s79 = sphi 0, %s76
      %s80 = sphi 0, %s79
      %s96 = sphi 0, %s80
      %s104 = sphi 0, %s106
      %s107 = sphi 0, %s104
      %s108 = sphi 0, %s107
      %s124 = sphi 0, %s108
    $region4: #{tpu_custom_call.1} parent=1 // loop_header_branch
      %18 = sbr.rel (%p16) target = $region8
    $region5: #{tpu_custom_call.1} parent=1 // loop_body
      %s20 = ssub.s32 %s15, 1
      %s21 = ssub.s32 %s15, 2
      %s31 = sadd.s32 1, %s24
      %p32 = scmp.ge.s32.totalorder %s31, 4
      %s33 = scalar_select %p32, 0, %s31
      %s34 = sadd.s32 1, %s23
      %s35 = scalar_select %p32, %s34, %s23
      %p36 = scmp.ge.s32.totalorder %s35, 1
      %s37 = scalar_select %p36, 0, %s35
      %s38 = sadd.s32 1, %s22
      %s39 = scalar_select %p36, %s38, %s22
      %p40 = scmp.ge.s32.totalorder %s39, 1
      %s41 = scalar_select %p40, 0, %s39
      %s42 = ssub.s32 %s24, %s33
      %s43 = ssub.s32 %s22, %s41
      %s44 = sor.u32 %s42, %s43
      %s45 = ssub.s32 %s23, %s37
      %s46 = sor.u32 %s44, %s45
      %p47 = scmp.eq.s32.totalorder %s46, 0
      %s49 = sadd.s32 %s48, 1
      %s50 = scalar_select %p47, %s48, %s49
      %p53 = pneg %p47
      %p54 = scmp.eq.s32.totalorder %s15, 3
      %p55 = por %p53, %p54
      %p56 = scmp.ne.s32.totalorder %s48, %s51
      %p57 = scmp.eq.s32.totalorder %s15, 0
      %p58 = por %p56, %p57
      %p59 = scmp.ne.s32.totalorder %s48, %s51
      %p60 = scmp.eq.s32.totalorder %s20, 3
      %p61 = por %p59, %p60
      %p62 = scmp.ne.s32.totalorder %s51, %s52
      %p63 = scmp.eq.s32.totalorder %s20, 0
      %p64 = por %p62, %p63
      %p65 = scmp.ne.s32.totalorder %s51, %s52
      %p66 = scmp.eq.s32.totalorder %s21, 3
      %p67 = por %p65, %p66
      %p69 = scmp.ne.s32.totalorder %s52, %s68
      %p70 = scmp.eq.s32.totalorder %s21, 0
      %p71 = por %p69, %p70
      %s72 = ssub.s32 %s24, %s33
      %s73 = ssub.s32 %s22, %s41
      %s74 = sor.u32 %s72, %s73
      %p75 = scmp.eq.s32.totalorder %s74, 0
      %s77 = sadd.s32 %s76, 1
      %s78 = scalar_select %p75, %s76, %s77
      %p81 = pneg %p75
      %p82 = scmp.eq.s32.totalorder %s15, 3
      %p83 = por %p81, %p82
      %p84 = scmp.ne.s32.totalorder %s76, %s79
      %p85 = scmp.eq.s32.totalorder %s15, 0
      %p86 = por %p84, %p85
      %p87 = scmp.ne.s32.totalorder %s76, %s79
      %p88 = scmp.eq.s32.totalorder %s20, 3
      %p89 = por %p87, %p88
      %p90 = scmp.ne.s32.totalorder %s79, %s80
      %p91 = scmp.eq.s32.totalorder %s20, 0
      %p92 = por %p90, %p91
      %p93 = scmp.ne.s32.totalorder %s79, %s80
      %p94 = scmp.eq.s32.totalorder %s21, 3
      %p95 = por %p93, %p94
      %p97 = scmp.ne.s32.totalorder %s80, %s96
      %p98 = scmp.eq.s32.totalorder %s21, 0
      %p99 = por %p97, %p98
      %s100 = ssub.s32 %s22, %s41
      %s101 = ssub.s32 %s23, %s37
      %s102 = sor.u32 %s100, %s101
      %p103 = scmp.eq.s32.totalorder %s102, 0
      %s105 = sadd.s32 %s104, 1
      %s106 = scalar_select %p103, %s104, %s105
      %p109 = pneg %p103
      %p110 = scmp.eq.s32.totalorder %s15, 3
      %p111 = por %p109, %p110
      %p112 = scmp.ne.s32.totalorder %s104, %s107
      %p113 = scmp.eq.s32.totalorder %s15, 0
      %p114 = por %p112, %p113
      %p115 = scmp.ne.s32.totalorder %s104, %s107
      %p116 = scmp.eq.s32.totalorder %s20, 3
      %p117 = por %p115, %p116
      %p118 = scmp.ne.s32.totalorder %s107, %s108
      %p119 = scmp.eq.s32.totalorder %s20, 0
      %p120 = por %p118, %p119
      %p121 = scmp.ne.s32.totalorder %s107, %s108
      %p122 = scmp.eq.s32.totalorder %s21, 3
      %p123 = por %p121, %p122
      %p125 = scmp.ne.s32.totalorder %s108, %s124
      %p126 = scmp.eq.s32.totalorder %s21, 0
      %p127 = por %p125, %p126
      %p128 = scmp.le.s32.totalorder 1, %s15
      %p129 = scmp.lt.s32.totalorder %s15, 5
      %p130 = pnand %p128, %p129
      %p131 = pneg %p130
      // Predicated region
      $region9: #{tpu_custom_call.1} parent=5 // pred_check
        _
      $region10: #{tpu_custom_call.1} parent=5 // pred_check_branch
        %133 = sbr.rel (%p130) target = $region12
      $region11: #{tpu_custom_call.1} parent=5 // pred_region
        %s134 = ssub.s32 %s15, 1
      $region12: #{tpu_custom_call.1} parent=5 // pred_fallthru
        _
      %p135 = scmp.lt.s32.totalorder %s15, 4
      // Predicated region
      $region13: #{tpu_custom_call.1} parent=5 // pred_check
        %p136 = pneg %p135
      $region14: #{tpu_custom_call.1} parent=5 // pred_check_branch
        %138 = sbr.rel (%p136) target = $region16
      $region15: #{tpu_custom_call.1} parent=5 // pred_region
        // Predicated region
        $region17: #{tpu_custom_call.1} parent=15 // pred_check
          %p139 = pneg %p58
        $region18: #{tpu_custom_call.1} parent=15 // pred_check_branch
          %141 = sbr.rel (%p139) target = $region20
        $region19: #{tpu_custom_call.1} parent=15 // pred_region
          %s142 = sand.u32 %s48, 1
          %s143 = scalar_lea.sflag [#allocation3], %s142
          %s144 = sand.u32 %s48, 1
          %s145 = smul.addr %s144, 6
          %s146 = scalar_lea.vmem [#allocation2], %s145
          %148 = vsyncadd %s143, 0
          %s149 = sadd.s32 %s23, %s22
          %s150 = sadd.s32 %s149, %s24
          %s151 = smul.addr %s150, 2
          %s152 = scalar_lea.hbm %s0, %s151
          %s153 = sshll.u32 %s152, 4
          %s154 = int_to_ptr.hbm [resolvable:$true] %s153
          %s155 = sshll.u32 %s146, 4
          %s156 = int_to_ptr.vmem [resolvable:$true] %s155
          %161 = dma.hbm_to_vmem [thread:$0]  %s154, 96, %s156, %s143, 128, 32, 2
        $region20: #{tpu_custom_call.1} parent=15 // pred_fallthru
          _
        // Predicated region
        $region21: #{tpu_custom_call.1} parent=15 // pred_check
          %p162 = pneg %p86
        $region22: #{tpu_custom_call.1} parent=15 // pred_check_branch
          %164 = sbr.rel (%p162) target = $region24
        $region23: #{tpu_custom_call.1} parent=15 // pred_region
          %s165 = sand.u32 %s76, 1
          %s166 = scalar_lea.sflag [#allocation6], %s165
          %s167 = sand.u32 %s76, 1
          %s168 = smul.addr %s167, 2
          %s169 = scalar_lea.vmem [#allocation5], %s168
          %171 = vsyncadd %s166, 0
          %s172 = sadd.s32 %s22, %s24
          %s173 = smul.addr %s172, 2
          %s174 = scalar_lea.hbm %s1, %s173
          %s176 = sshll.u32 %s174, 4
          %s177 = int_to_ptr.hbm [resolvable:$true] %s176
          %s178 = sshll.u32 %s169, 4
          %s179 = int_to_ptr.vmem [resolvable:$true] %s178
          %181 = dma.hbm_to_vmem [thread:$0]  %s177, 32, %s179, %s166
        $region24: #{tpu_custom_call.1} parent=15 // pred_fallthru
          _
      $region16: #{tpu_custom_call.1} parent=5 // pred_fallthru
        _
      %p182 = scmp.le.s32.totalorder 1, %s15
      %p183 = scmp.lt.s32.totalorder %s15, 5
      %p184 = pnand %p182, %p183
      %p185 = pneg %p184
      // Predicated region
      $region25: #{tpu_custom_call.1} parent=5 // pred_check
        _
      $region26: #{tpu_custom_call.1} parent=5 // pred_check_branch
        %187 = sbr.rel (%p184) target = $region28
      $region27: #{tpu_custom_call.1} parent=5 // pred_region
        %s188 = ssub.s32 %s15, 1
        %s189 = sand.u32 %s51, 1
        %s190 = scalar_lea.sflag [#allocation3], %s189
        %s191 = sand.u32 %s51, 1
        %s192 = smul.addr %s191, 6
        %s193 = scalar_lea.vmem [#allocation2], %s192
        // Predicated region
        $region29: #{tpu_custom_call.1} parent=27 // pred_check
          %p194 = pneg %p64
        $region30: #{tpu_custom_call.1} parent=27 // pred_check_branch
          %196 = sbr.rel (%p194) target = $region32
        $region31: #{tpu_custom_call.1} parent=27 // pred_region
          %198 = dma.done %s190, 96
        $region32: #{tpu_custom_call.1} parent=27 // pred_fallthru
          _
        %s199 = sand.u32 %s79, 1
        %s200 = scalar_lea.sflag [#allocation6], %s199
        %s201 = sand.u32 %s79, 1
        %s202 = smul.addr %s201, 2
        %s203 = scalar_lea.vmem [#allocation5], %s202
        // Predicated region
        $region33: #{tpu_custom_call.1} parent=27 // pred_check
          %p204 = pneg %p92
        $region34: #{tpu_custom_call.1} parent=27 // pred_check_branch
          %206 = sbr.rel (%p204) target = $region36
        $region35: #{tpu_custom_call.1} parent=27 // pred_region
          %208 = dma.done %s200, 32
        $region36: #{tpu_custom_call.1} parent=27 // pred_fallthru
          _
        %s209 = sand.u32 %s51, 1
        %s210 = scalar_lea.sflag [#allocation3], %s209
        %s211 = sand.u32 %s51, 1
        %s212 = smul.addr %s211, 6
        %s213 = scalar_lea.vmem [#allocation2], %s212
        %p214 = pneg %p64
        %p215 = pneg %p61
        %s216 = sand.u32 %s79, 1
        %s217 = scalar_lea.sflag [#allocation6], %s216
        %s218 = sand.u32 %s79, 1
        %s219 = smul.addr %s218, 2
        %s220 = scalar_lea.vmem [#allocation5], %s219
        %p221 = pneg %p92
        %p222 = pneg %p89
        %p223 = pneg %p120
        %p224 = pneg %p117
        %v225 = vld [vmem:[%s203] sm:$0x3]
        %v226 = vld [vmem:[%s193] sm:$0x3]
        %228 = vset.pattern.permute.xlu0 0
        %229 = vperm.xlu0 %228, %v225
        %v230 = vpop.permute.xlu0 %229
        %v232 = vsub.f32 %v226, %v230
        %s233 = scalar_lea.vmem %s193, 2 [#allocation2]
        %v234 = vld [vmem:[%s233] sm:$0x3]
        %235 = vset.pattern.permute.xlu0 1
        %236 = vperm.xlu0 %235, %v225
        %v237 = vpop.permute.xlu0 %236
        %v239 = vsub.f32 %v234, %v237
        %s240 = scalar_lea.vmem %s193, 4 [#allocation2]
        %v241 = vld [vmem:[%s240] sm:$0x3]
        %242 = vset.pattern.permute.xlu0 2
        %243 = vperm.xlu0 %242, %v225
        %v244 = vpop.permute.xlu0 %243
        %v246 = vsub.f32 %v241, %v244
        %247 = vset.pattern.permute.xlu0 3
        %248 = vperm.xlu0 %247, %v225
        %v249 = vpop.permute.xlu0 %248
        %v251 = vmul.f32 %v249, %v232
        %252 = vset.pattern.permute.xlu0 4
        %253 = vperm.xlu0 %252, %v225
        %v254 = vpop.permute.xlu0 %253
        %v256 = vmul.f32 %v254, %v239
        %v257 = vadd.f32 %v251, %v256
        %258 = vset.pattern.permute.xlu0 5
        %259 = vperm.xlu0 %258, %v225
        %v260 = vpop.permute.xlu0 %259
        %v262 = vmul.f32 %v260, %v246
        %v263 = vadd.f32 %v257, %v262
        %264 = vset.pattern.permute.xlu0 6
        %265 = vperm.xlu0 %264, %v225
        %v266 = vpop.permute.xlu0 %265
        %v268 = vmul.f32 %v266, %v232
        %269 = vset.pattern.permute.xlu0 7
        %270 = vperm.xlu0 %269, %v225
        %v271 = vpop.permute.xlu0 %270
        %v273 = vmul.f32 %v271, %v239
        %v274 = vadd.f32 %v268, %v273
        %275 = vset.pattern.permute.xlu0 8
        %276 = vperm.xlu0 %275, %v225
        %v277 = vpop.permute.xlu0 %276
        %v279 = vmul.f32 %v277, %v246
        %v280 = vadd.f32 %v274, %v279
        %281 = vset.pattern.permute.xlu0 9
        %282 = vperm.xlu0 %281, %v225
        %v283 = vpop.permute.xlu0 %282
        %v285 = vmul.f32 %v283, %v232
        %286 = vset.pattern.permute.xlu0 10
        %287 = vperm.xlu0 %286, %v225
        %v288 = vpop.permute.xlu0 %287
        %v290 = vmul.f32 %v288, %v239
        %v291 = vadd.f32 %v285, %v290
        %292 = vset.pattern.permute.xlu0 11
        %293 = vperm.xlu0 %292, %v225
        %v294 = vpop.permute.xlu0 %293
        %v296 = vmul.f32 %v294, %v246
        %v297 = vadd.f32 %v291, %v296
        %v298 = vand.u32 2147483647, %v263
        %299 = vset.pattern.permute.xlu0 12
        %300 = vperm.xlu0 %299, %v225
        %v301 = vpop.permute.xlu0 %300
        %v303 = vsub.f32 %v298, %v301
        %v304 = vmax.f32 %v303, 0.0
        %v305 = vand.u32 2147483647, %v280
        %306 = vset.pattern.permute.xlu0 13
        %307 = vperm.xlu0 %306, %v225
        %v308 = vpop.permute.xlu0 %307
        %v310 = vsub.f32 %v305, %v308
        %v311 = vmax.f32 %v310, 0.0
        %v312 = vand.u32 2147483647, %v297
        %313 = vset.pattern.permute.xlu0 14
        %314 = vperm.xlu0 %313, %v225
        %v315 = vpop.permute.xlu0 %314
        %v317 = vsub.f32 %v312, %v315
        %v318 = vmax.f32 %v317, 0.0
        %v319 = vmul.f32 %v304, %v304
        %v320 = vmul.f32 %v311, %v311
        %v321 = vadd.f32 %v319, %v320
        %v322 = vmul.f32 %v318, %v318
        %v323 = vadd.f32 %v321, %v322
        %324 = vset.pattern.permute.xlu0 15
        %325 = vperm.xlu0 %324, %v225
        %v326 = vpop.permute.xlu0 %325
        %v328 = vadd.f32 %v323, %v326
        %p329 = scmp.eq.s32.totalorder %s27, 0
        // Predicated region
        $region37: #{tpu_custom_call.1} parent=27 // pred_check
          %p330 = pneg %p329
        $region38: #{tpu_custom_call.1} parent=27 // pred_check_branch
          %332 = sbr.rel (%p330) target = $region40
        $region39: #{tpu_custom_call.1} parent=27 // pred_region
          %333 = vst [vmem:[#allocation7] sm:$0x3] %v328
        $region40: #{tpu_custom_call.1} parent=27 // pred_fallthru
          _
        %p334 = scmp.gt.s32.totalorder %s27, 0
        // Predicated region
        $region41: #{tpu_custom_call.1} parent=27 // pred_check
          %p335 = pneg %p334
        $region42: #{tpu_custom_call.1} parent=27 // pred_check_branch
          %337 = sbr.rel (%p335) target = $region44
        $region43: #{tpu_custom_call.1} parent=27 // pred_region
          %v338 = vld [vmem:[#allocation7] sm:$0x3]
          %v339 = vmin.f32 %v338, %v328
          %340 = vst [vmem:[#allocation7] sm:$0x3] %v339
        $region44: #{tpu_custom_call.1} parent=27 // pred_fallthru
          _
        // Predicated region
        $region45: #{tpu_custom_call.1} parent=27 // pred_check
          %p341 = pneg %p117
        $region46: #{tpu_custom_call.1} parent=27 // pred_check_branch
          %343 = sbr.rel (%p341) target = $region48
        $region47: #{tpu_custom_call.1} parent=27 // pred_region
          %345 = vsyncadd [#allocation4], 0
          %s346 = sadd.s32 %s26, %s25
          %s347 = smul.addr %s346, 2
          %s348 = scalar_lea.hbm %s2, %s347
          %s350 = sshll.u32 [#allocation7], 4
          %s351 = int_to_ptr.vmem [resolvable:$true] %s350
          %s352 = sshll.u32 %s348, 4
          %s353 = int_to_ptr.hbm [resolvable:$true] %s352
          %355 = dma.vmem_to_hbm [thread:$0]  %s351, 32, %s353, [#allocation4]
        $region48: #{tpu_custom_call.1} parent=27 // pred_fallthru
          _
        // Predicated region
        $region49: #{tpu_custom_call.1} parent=27 // pred_check
          %p356 = pneg %p117
        $region50: #{tpu_custom_call.1} parent=27 // pred_check_branch
          %358 = sbr.rel (%p356) target = $region52
        $region51: #{tpu_custom_call.1} parent=27 // pred_region
          %360 = dma.done [#allocation4], 32
        $region52: #{tpu_custom_call.1} parent=27 // pred_fallthru
          _
      $region28: #{tpu_custom_call.1} parent=5 // pred_fallthru
        _
      %p361 = scmp.le.s32.totalorder 2, %s15
      // Predicated region
      $region53: #{tpu_custom_call.1} parent=5 // pred_check
        %p362 = pneg %p361
      $region54: #{tpu_custom_call.1} parent=5 // pred_check_branch
        %364 = sbr.rel (%p362) target = $region56
      $region55: #{tpu_custom_call.1} parent=5 // pred_region
        %s365 = ssub.s32 %s15, 2
      $region56: #{tpu_custom_call.1} parent=5 // pred_fallthru
        _
    $region6: #{tpu_custom_call.1} parent=1 // loop_footer
      %s19 = sadd.s32 1, %s15
    $region7: #{tpu_custom_call.1} parent=1 // loop_footer_branch
      %14 = sbr.rel target = $region3
    $region8: #{tpu_custom_call.1} parent=1 // loop_exit
      _
    %366 = vsyncpa [#allocation3], 1
    %s367 = scalar_lea.sflag [#allocation3], 1
    %368 = vsyncpa %s367, 1
    %369 = vsyncpa [#allocation6], 1
    %s370 = scalar_lea.sflag [#allocation6], 1
    %371 = vsyncpa %s370, 1
    %372 = vsyncpa [#allocation4], 1
    %s373 = scalar_lea.sflag [#allocation4], 1
    %374 = vsyncpa %s373, 1

</llo_original>
